<compile_context>
chip_gen: v7x
topology: tpu7x:2x2x1
jax: 0.10.0
libtpu: 0.0.40
codegen_flags: <defaults>
</compile_context>

<pallas_src>
import jax
import jax.numpy as jnp
from jax.experimental import pallas as pl
from jax.experimental.pallas import tpu as pltpu


def besquet_mlp_kernel(x_ref, w1_ref, b1_ref, w2_ref, b2_ref, w3_ref, b3_ref,
                       o_ref, h1_ref):
    """Fused 3-layer MLP for one batch tile.

    x:[tb,36] (f32 or bf16)  W1:[36,128]bf16  W2:[128,256]bf16
    W3(row):[1,256]f32  out:[tb,1]f32  h1 scratch:[tb,128]bf16.
    """
    x = x_ref[...]
    if x.dtype != jnp.bfloat16:          # static (trace-time) branch
        x = x.astype(jnp.bfloat16)

    # Layer 1: bf16 MXU matmul, f32 accumulate, f32 bias + ReLU, bf16 store.
    h1 = jnp.dot(x, w1_ref[...], preferred_element_type=jnp.float32) + b1_ref[...]
    h1_ref[...] = jnp.maximum(h1, 0.0).astype(jnp.bfloat16)

    # Layer 2: bf16 MXU matmul, f32 accumulate, f32 bias + ReLU (kept local —
    # no VMEM round-trip before the reduction).
    h2 = jnp.dot(h1_ref[...], w2_ref[...],
                 preferred_element_type=jnp.float32) + b2_ref[...]
    h2 = jnp.maximum(h2, 0.0)

    # Layer 3 (out_features = 1): VPU multiply + XLU lane reduction instead of
    # an N=1 MXU matmul.
    out = jnp.sum(h2 * w3_ref[...], axis=-1, keepdims=True) + b3_ref[...]
    o_ref[...] = out.astype(o_ref.dtype)


def besquet_mlp(features, params, *, tile_b_cap=2048):
    """Run the fused besquet MLP kernel, tiled over the batch dimension."""
    B, F = features.shape
    w1, b1, w2, b2, w3, b3 = params
    H1 = w1.shape[1]
    H2 = w2.shape[1]

    # Tile sizing (no data is padded/copied on the host side):
    #   * round batch up to sublane granularity (8) for tile sizing only,
    #   * clamp the tile to ~half the batch so large batches keep >= 2 grid
    #     steps (v7x has 2 TensorCores sharing the "parallel" axis),
    #   * cap at tile_b_cap (VMEM stays a few MB even at 2048).
    B8 = pl.cdiv(B, 8) * 8
    half = max(8, (B8 // 2) // 8 * 8)
    tile_b = min(tile_b_cap, half, B8)

    grid = (pl.cdiv(B, tile_b),)  # ragged last block handled by Pallas masking

    out = pl.pallas_call(
        besquet_mlp_kernel,
        out_shape=jax.ShapeDtypeStruct((B, 1), jnp.float32),
        grid=grid,
        in_specs=[
            pl.BlockSpec((tile_b, F), lambda i: (i, 0)),   # features tile
            pl.BlockSpec((F, H1), lambda i: (0, 0)),       # W1 (resident, bf16)
            pl.BlockSpec((1, H1), lambda i: (0, 0)),       # b1
            pl.BlockSpec((H1, H2), lambda i: (0, 0)),      # W2 (resident, bf16)
            pl.BlockSpec((1, H2), lambda i: (0, 0)),       # b2
            pl.BlockSpec((1, H2), lambda i: (0, 0)),       # W3 as a row vector
            pl.BlockSpec((1, 1), lambda i: (0, 0)),        # b3
        ],
        out_specs=pl.BlockSpec((tile_b, 1), lambda i: (i, 0)),
        scratch_shapes=[
            pltpu.VMEM((tile_b, H1), jnp.bfloat16),        # h1 (bf16)
        ],
        compiler_params=pltpu.CompilerParams(
            dimension_semantics=("parallel",),
        ),
    )(features, w1, b1, w2, b2, w3, b3)

    return out  # already exactly (B, 1); no slicing / padding removal needed


def init_besquet_params(key):
    """Deterministic init matching nn.Linear's U(-1/sqrt(fan_in), 1/sqrt(fan_in)).

    Hidden-layer weights are stored [in, out] in bfloat16; the final (256 -> 1)
    weight is stored as a float32 (1, 256) row vector; biases are float32,
    shape (1, out).
    """
    dims = [(36, 128), (128, 256), (256, 1)]
    params = []
    for li, (fin, fout) in enumerate(dims):
        key, kw, kb = jax.random.split(key, 3)
        bound = 1.0 / (fin ** 0.5)
        w = jax.random.uniform(kw, (fin, fout), jnp.float32, -bound, bound)
        b = jax.random.uniform(kb, (1, fout), jnp.float32, -bound, bound)
        if li < 2:
            params += [w.astype(jnp.bfloat16), b]
        else:
            params += [w.T, b]  # (1, 256) row vector for the VPU-reduce layer
    return tuple(params)


class MobileNetV3LargePallas:
    """Pallas equivalent of the reference MobileNetV3Large module's forward()."""

    def __init__(self, params):
        self.params = params

    def __call__(self, x, features=None):
        if features is not None:
            return besquet_mlp(features, self.params)
        # TODO(synk): the mobilenet_v3_large backbone is unreachable in the
        # reference forward (it only computes when `features` is not None),
        # so it is intentionally not implemented; forward returns None here
        # exactly like the PyTorch module.
        return None


def besquet_mlp_reference(features, params):
    """Plain-JAX reference with the same bf16-weight / f32-accumulate recipe."""
    w1, b1, w2, b2, w3, b3 = params
    h1 = jnp.dot(features.astype(jnp.bfloat16), w1,
                 preferred_element_type=jnp.float32) + b1
    h1 = jnp.maximum(h1, 0.0).astype(jnp.bfloat16)
    h2 = jnp.dot(h1, w2, preferred_element_type=jnp.float32) + b2
    h2 = jnp.maximum(h2, 0.0)
    return jnp.sum(h2 * w3, axis=-1, keepdims=True) + b3


if __name__ == "__main__":
    key = jax.random.PRNGKey(0)
    key, kx, kf = jax.random.split(key, 3)

    # Image input (unused by forward, kept for interface parity; 4 channels
    # because config.change_first_layer swaps the stem conv to 4-channel input).
    x = jax.random.normal(kx, (2, 4, 16, 16), jnp.float32)
    # The live input: `features`, shape [batch, 36].
    features = jax.random.normal(kf, (8, 36), jnp.float32)

    params = init_besquet_params(key)
    model = MobileNetV3LargePallas(params)

    out = model(x, features=features)
    out = jax.block_until_ready(out)

    ref = besquet_mlp_reference(features, params)
    assert out.shape == (8, 1), out.shape
    assert jnp.allclose(out, ref, atol=1e-2, rtol=1e-2), "mismatch vs. reference"

    # Batch that is not a multiple of the tile: exercises the ragged last
    # block (no wrapper-side pad) and a grid length >= 2.
    feats_odd = jax.random.normal(key, (13, 36), jnp.float32)
    out_odd = jax.block_until_ready(model(x, features=feats_odd))
    ref_odd = besquet_mlp_reference(feats_odd, params)
    assert out_odd.shape == (13, 1), out_odd.shape
    assert jnp.allclose(out_odd, ref_odd, atol=1e-2, rtol=1e-2), "mismatch (ragged batch)"

    # bf16 features supplied directly by the producer (no wrapper cast added).
    feats_bf16 = features.astype(jnp.bfloat16)
    out_bf16 = jax.block_until_ready(model(x, features=feats_bf16))
    ref_bf16 = besquet_mlp_reference(feats_bf16, params)
    assert out_bf16.shape == (8, 1), out_bf16.shape
    assert jnp.allclose(out_bf16, ref_bf16, atol=1e-2, rtol=1e-2), "mismatch (bf16 features)"

    # x-only call returns None, matching the PyTorch module.
    assert model(x) is None

    print("KERNEL_OK")
</pallas_src>

<mosaic_0001>
module attributes {stable_mosaic.version = 11 : i64} {
  func.func @besquet_mlp_kernel(%arg0: i32, %arg1: memref<8x36xf32, #tpu.memory_space<vmem>>, %arg2: memref<36x128xbf16, #tpu.memory_space<vmem>>, %arg3: memref<1x128xf32, #tpu.memory_space<vmem>>, %arg4: memref<128x256xbf16, #tpu.memory_space<vmem>>, %arg5: memref<1x256xf32, #tpu.memory_space<vmem>>, %arg6: memref<1x256xf32, #tpu.memory_space<vmem>>, %arg7: memref<1x1xf32, #tpu.memory_space<vmem>>, %arg8: memref<8x1xf32, #tpu.memory_space<vmem>>, %arg9: memref<8x128xbf16, #tpu.memory_space<vmem>>) attributes {dimension_semantics = [#tpu.dimension_semantics<parallel>], iteration_bounds = array<i64: 1>, scalar_prefetch = 0 : i64, scratch_operands = 1 : i64, tpu.core_type = #tpu.core_type<tc>, window_params = [{transform_indices = @transform_0, window_bounds = array<i64: 8, 36>}, {pipeline_mode = #tpu.pipeline_mode<synchronous>, transform_indices = @transform_1, window_bounds = array<i64: 36, 128>}, {pipeline_mode = #tpu.pipeline_mode<synchronous>, transform_indices = @transform_2, window_bounds = array<i64: 1, 128>}, {pipeline_mode = #tpu.pipeline_mode<synchronous>, transform_indices = @transform_3, window_bounds = array<i64: 128, 256>}, {pipeline_mode = #tpu.pipeline_mode<synchronous>, transform_indices = @transform_4, window_bounds = array<i64: 1, 256>}, {pipeline_mode = #tpu.pipeline_mode<synchronous>, transform_indices = @transform_5, window_bounds = array<i64: 1, 256>}, {pipeline_mode = #tpu.pipeline_mode<synchronous>, transform_indices = @transform_6, window_bounds = array<i64: 1, 1>}, {transform_indices = @transform_7, window_bounds = array<i64: 8, 1>}]} {
    %c0 = arith.constant 0 : index
    %c0_0 = arith.constant 0 : index
    %0 = vector.load %arg1[%c0, %c0_0] : memref<8x36xf32, #tpu.memory_space<vmem>>, vector<8x36xf32>
    %1 = arith.truncf %0 : vector<8x36xf32> to vector<8x36xbf16>
    %c0_1 = arith.constant 0 : index
    %c0_2 = arith.constant 0 : index
    %2 = vector.load %arg2[%c0_1, %c0_2] : memref<36x128xbf16, #tpu.memory_space<vmem>>, vector<36x128xbf16>
    %cst = arith.constant dense<0.000000e+00> : vector<8x128xf32>
    %3 = tpu.matmul %1, %2, %cst {dimension_numbers = #tpu.dot_dimension_numbers<[1], [0], [0], [1], [0, 0, 1, 1], [], []>} : vector<8x36xbf16>, vector<36x128xbf16>, vector<8x128xf32> -> vector<8x128xf32>
    %c0_3 = arith.constant 0 : index
    %c0_4 = arith.constant 0 : index
    %4 = vector.load %arg3[%c0_3, %c0_4] : memref<1x128xf32, #tpu.memory_space<vmem>>, vector<1x128xf32>
    %5 = vector.broadcast %4 : vector<1x128xf32> to vector<8x128xf32>
    %6 = arith.addf %3, %5 : vector<8x128xf32>
    %cst_5 = arith.constant 0.000000e+00 : f32
    %7 = vector.broadcast %cst_5 : f32 to vector<8x128xf32>
    %8 = arith.maximumf %6, %7 : vector<8x128xf32>
    %9 = arith.truncf %8 : vector<8x128xf32> to vector<8x128xbf16>
    %c0_6 = arith.constant 0 : index
    %c0_7 = arith.constant 0 : index
    %10 = vector.load %arg9[%c0_6, %c0_7] : memref<8x128xbf16, #tpu.memory_space<vmem>>, vector<8x128xbf16>
    tpu.vector_store %arg9[%c0_6, %c0_7], %9 {strides = array<i32>} : memref<8x128xbf16, #tpu.memory_space<vmem>>, vector<8x128xbf16>,
    %c0_8 = arith.constant 0 : index
    %c0_9 = arith.constant 0 : index
    %11 = vector.load %arg9[%c0_8, %c0_9] : memref<8x128xbf16, #tpu.memory_space<vmem>>, vector<8x128xbf16>
    %c0_10 = arith.constant 0 : index
    %c0_11 = arith.constant 0 : index
    %12 = vector.load %arg4[%c0_10, %c0_11] : memref<128x256xbf16, #tpu.memory_space<vmem>>, vector<128x256xbf16>
    %cst_12 = arith.constant dense<0.000000e+00> : vector<8x256xf32>
    %13 = tpu.matmul %11, %12, %cst_12 {dimension_numbers = #tpu.dot_dimension_numbers<[1], [0], [0], [1], [0, 0, 1, 1], [], []>} : vector<8x128xbf16>, vector<128x256xbf16>, vector<8x256xf32> -> vector<8x256xf32>
    %c0_13 = arith.constant 0 : index
    %c0_14 = arith.constant 0 : index
    %14 = vector.load %arg5[%c0_13, %c0_14] : memref<1x256xf32, #tpu.memory_space<vmem>>, vector<1x256xf32>
    %15 = vector.broadcast %14 : vector<1x256xf32> to vector<8x256xf32>
    %16 = arith.addf %13, %15 : vector<8x256xf32>
    %cst_15 = arith.constant 0.000000e+00 : f32
    %17 = vector.broadcast %cst_15 : f32 to vector<8x256xf32>
    %18 = arith.maximumf %16, %17 : vector<8x256xf32>
    %c0_16 = arith.constant 0 : index
    %c0_17 = arith.constant 0 : index
    %19 = vector.load %arg6[%c0_16, %c0_17] : memref<1x256xf32, #tpu.memory_space<vmem>>, vector<1x256xf32>
    %20 = vector.broadcast %19 : vector<1x256xf32> to vector<8x256xf32>
    %21 = arith.mulf %18, %20 : vector<8x256xf32>
    %cst_18 = arith.constant dense<0.000000e+00> : vector<8xf32>
    %22 = vector.multi_reduction <add>, %21, %cst_18 [1] : vector<8x256xf32> to vector<8xf32>
    %23 = vector.shape_cast %22 : vector<8xf32> to vector<8x1xf32>
    %c0_19 = arith.constant 0 : index
    %c0_20 = arith.constant 0 : index
    %24 = vector.load %arg7[%c0_19, %c0_20] : memref<1x1xf32, #tpu.memory_space<vmem>>, vector<1x1xf32>
    %25 = vector.broadcast %24 : vector<1x1xf32> to vector<8x1xf32>
    %26 = arith.addf %23, %25 : vector<8x1xf32>
    %c0_21 = arith.constant 0 : index
    %c0_22 = arith.constant 0 : index
    %27 = vector.load %arg8[%c0_21, %c0_22] : memref<8x1xf32, #tpu.memory_space<vmem>>, vector<8x1xf32>
    tpu.vector_store %arg8[%c0_21, %c0_22], %26 {strides = array<i32>} : memref<8x1xf32, #tpu.memory_space<vmem>>, vector<8x1xf32>,
    return
  }
  func.func @transform_0(%arg0: i32) -> (i32, i32) {
    %c0_i32 = arith.constant 0 : i32
    %c0_i32_0 = arith.constant 0 : i32
    return %arg0, %c0_i32 : i32, i32
  }
  func.func @transform_1(%arg0: i32) -> (i32, i32) {
    %c0_i32 = arith.constant 0 : i32
    %c0_i32_0 = arith.constant 0 : i32
    %c0_i32_1 = arith.constant 0 : i32
    return %c0_i32, %c0_i32_0 : i32, i32
  }
  func.func @transform_2(%arg0: i32) -> (i32, i32) {
    %c0_i32 = arith.constant 0 : i32
    %c0_i32_0 = arith.constant 0 : i32
    %c0_i32_1 = arith.constant 0 : i32
    return %c0_i32, %c0_i32_0 : i32, i32
  }
  func.func @transform_3(%arg0: i32) -> (i32, i32) {
    %c0_i32 = arith.constant 0 : i32
    %c0_i32_0 = arith.constant 0 : i32
    %c0_i32_1 = arith.constant 0 : i32
    return %c0_i32, %c0_i32_0 : i32, i32
  }
  func.func @transform_4(%arg0: i32) -> (i32, i32) {
    %c0_i32 = arith.constant 0 : i32
    %c0_i32_0 = arith.constant 0 : i32
    %c0_i32_1 = arith.constant 0 : i32
    return %c0_i32, %c0_i32_0 : i32, i32
  }
  func.func @transform_5(%arg0: i32) -> (i32, i32) {
    %c0_i32 = arith.constant 0 : i32
    %c0_i32_0 = arith.constant 0 : i32
    %c0_i32_1 = arith.constant 0 : i32
    return %c0_i32, %c0_i32_0 : i32, i32
  }
  func.func @transform_6(%arg0: i32) -> (i32, i32) {
    %c0_i32 = arith.constant 0 : i32
    %c0_i32_0 = arith.constant 0 : i32
    %c0_i32_1 = arith.constant 0 : i32
    return %c0_i32, %c0_i32_0 : i32, i32
  }
  func.func @transform_7(%arg0: i32) -> (i32, i32) {
    %c0_i32 = arith.constant 0 : i32
    %c0_i32_0 = arith.constant 0 : i32
    return %arg0, %c0_i32 : i32, i32
  }
}

</mosaic_0001>

<llo_original>
// kernel: tpu_custom_call.1
$region0: #{tpu_custom_call.1}
  #allocation0 [shape = 'u32[]', space=smem, size = 0x4, offset = 0x4, fixed_abs, tag = 'smem constant byte address 0x4 - core index']
  #allocation1 [shape = 'u32[144,128]{1,0:T(1,128)}', space=vmem, size = 0x12000, scoped, tag = 'internal scratch']
  #allocation2 [shape = 'bf16[8,128]{1,0:T(8,128)(2,1)}', space=vmem, size = 0x800, scoped, tag = 'scratch operand']
  #allocation3 [shape = 'f32[1,1]{1,0:T(1,128)S(1)}', space=vmem, size = 0x200, scoped, tag = 'scoped memory for tpu_custom_call.1']
  %s0 = inlined_call_operand.hbm [shape: f32[8,36], index: 0, kind: input, shape index: {}]
  %s1 = inlined_call_operand.hbm [shape: bf16[36,128], index: 1, kind: input, shape index: {}]
  %s2 = inlined_call_operand.vmem [shape: f32[1,128], index: 2, kind: input, shape index: {}]
  %s3 = inlined_call_operand.hbm [shape: bf16[128,256], index: 3, kind: input, shape index: {}]
  %s4 = inlined_call_operand.vmem [shape: f32[1,256], index: 4, kind: input, shape index: {}]
  %s5 = inlined_call_operand.vmem [shape: f32[1,256], index: 5, kind: input, shape index: {}]
  %s6 = inlined_call_operand.<no memory space> [shape: f32[1,1], index: 6, kind: input, shape index: {}]
  %s7 = inlined_call_operand.vmem [shape: f32[8,1], index: 7, kind: output, shape index: {}]
  %s8 = sld [smem:[#allocation0]]
  $region50: #{tpu_custom_call.1} parent=0
    _
  %s10 = ssub.s32 1, %s8
  %s11 = scalar_select 0, %s10, %s8
  %v12 = vstv %s6
  %13 = vst [vmem:[#allocation3] sm:$0x1] %v12
  $region1: #{tpu_custom_call.1} parent=0
    #allocation4 [shape = 'u8[4096]{0}', space=vmem, size = 0x1000, scoped, tag = 'input window, operand 0, single buffered']
    #allocation5 [shape = 's32[1]{0}', space=sflag, size = 0x4, scoped, tag = 'scoped memory for tpu_custom_call.1']
    #allocation6 [shape = 'u8[10240]{0}', space=vmem, size = 0x2800, scoped, tag = 'input window, operand 1, single buffered']
    #allocation7 [shape = 's32[1]{0}', space=sflag, size = 0x4, scoped, tag = 'scoped memory for tpu_custom_call.1']
    #allocation8 [shape = 'u8[65536]{0}', space=vmem, size = 0x10000, scoped, tag = 'input window, operand 3, single buffered']
    %14 = vsyncpa [#allocation5], 0
    %15 = vsyncpa [#allocation7], 0
    // Predicated region
    $region2: #{tpu_custom_call.1} parent=1 // pred_check
      _
    $region3: #{tpu_custom_call.1} parent=1 // pred_check_branch
      %17 = sbr.rel (0) target = $region5
    $region4: #{tpu_custom_call.1} parent=1 // pred_region
      %s19 = ssub.s32 128, 128
      %20 = vsyncadd [#allocation5], %s19
      %s22 = sshll.u32 [#allocation4], 4
      %s23 = int_to_ptr.vmem [resolvable:$true] %s22
      %25 = dma.hbm_to_vmem [thread:$0]  %s0, 128, %s23, [#allocation5]
    $region5: #{tpu_custom_call.1} parent=1 // pred_fallthru
      _
    // Predicated region
    $region6: #{tpu_custom_call.1} parent=1 // pred_check
      _
    $region7: #{tpu_custom_call.1} parent=1 // pred_check_branch
      %27 = sbr.rel (0) target = $region9
    $region8: #{tpu_custom_call.1} parent=1 // pred_region
      %s29 = ssub.s32 320, 320
      %30 = vsyncadd [#allocation7], %s29
      %s31 = sshll.u32 [#allocation6], 4
      %s32 = int_to_ptr.vmem [resolvable:$true] %s31
      %37 = dma.hbm_to_vmem [thread:$0]  %s1, 320, %s32, [#allocation7], 64, 64, 4
    $region9: #{tpu_custom_call.1} parent=1 // pred_fallthru
      _
    // Predicated region
    $region10: #{tpu_custom_call.1} parent=1 // pred_check
      _
    $region11: #{tpu_custom_call.1} parent=1 // pred_check_branch
      %39 = sbr.rel (0) target = $region13
    $region12: #{tpu_custom_call.1} parent=1 // pred_region
      _
    $region13: #{tpu_custom_call.1} parent=1 // pred_fallthru
      _
    // Predicated region
    $region14: #{tpu_custom_call.1} parent=1 // pred_check
      _
    $region15: #{tpu_custom_call.1} parent=1 // pred_check_branch
      %41 = sbr.rel (0) target = $region17
    $region16: #{tpu_custom_call.1} parent=1 // pred_region
      %s43 = ssub.s32 2048, 2048
      %44 = vsyncadd [#allocation7], %s43
      %s45 = sshll.u32 [#allocation8], 4
      %s46 = int_to_ptr.vmem [resolvable:$true] %s45
      %51 = dma.hbm_to_vmem [thread:$0]  %s3, 2048, %s46, [#allocation7], 128, 128, 8
    $region17: #{tpu_custom_call.1} parent=1 // pred_fallthru
      _
    // Predicated region
    $region18: #{tpu_custom_call.1} parent=1 // pred_check
      _
    $region19: #{tpu_custom_call.1} parent=1 // pred_check_branch
      %53 = sbr.rel (0) target = $region21
    $region20: #{tpu_custom_call.1} parent=1 // pred_region
      _
    $region21: #{tpu_custom_call.1} parent=1 // pred_fallthru
      _
    // Predicated region
    $region22: #{tpu_custom_call.1} parent=1 // pred_check
      _
    $region23: #{tpu_custom_call.1} parent=1 // pred_check_branch
      %55 = sbr.rel (0) target = $region25
    $region24: #{tpu_custom_call.1} parent=1 // pred_region
      _
    $region25: #{tpu_custom_call.1} parent=1 // pred_fallthru
      _
    // Predicated region
    $region26: #{tpu_custom_call.1} parent=1 // pred_check
      _
    $region27: #{tpu_custom_call.1} parent=1 // pred_check_branch
      %57 = sbr.rel (0) target = $region29
    $region28: #{tpu_custom_call.1} parent=1 // pred_region
      _
    $region29: #{tpu_custom_call.1} parent=1 // pred_fallthru
      _
    // Predicated region
    $region30: #{tpu_custom_call.1} parent=1 // pred_check
      _
    $region31: #{tpu_custom_call.1} parent=1 // pred_check_branch
      %59 = sbr.rel (0) target = $region33
    $region32: #{tpu_custom_call.1} parent=1 // pred_region
      %60 = dma.done [#allocation5], 128
    $region33: #{tpu_custom_call.1} parent=1 // pred_fallthru
      _
    // Predicated region
    $region34: #{tpu_custom_call.1} parent=1 // pred_check
      _
    $region35: #{tpu_custom_call.1} parent=1 // pred_check_branch
      %62 = sbr.rel (0) target = $region37
    $region36: #{tpu_custom_call.1} parent=1 // pred_region
      %63 = dma.done [#allocation7], 320
    $region37: #{tpu_custom_call.1} parent=1 // pred_fallthru
      _
    // Predicated region
    $region38: #{tpu_custom_call.1} parent=1 // pred_check
      _
    $region39: #{tpu_custom_call.1} parent=1 // pred_check_branch
      %65 = sbr.rel (0) target = $region41
    $region40: #{tpu_custom_call.1} parent=1 // pred_region
      %66 = dma.done [#allocation7], 2048
    $region41: #{tpu_custom_call.1} parent=1 // pred_fallthru
      _
    %v68 = vld [vmem:[#allocation4] sm:$0xff]
    %v69 = vpack.c.bf16 %v68, %v68
    %v70 = vld [vmem:[#allocation6] sm:$0xf]
    %v71 = vld [vmem:[#allocation6 + $0x4] sm:$0xf]
    %v72 = vld [vmem:[#allocation6 + $0x8] sm:$0xf]
    %v73 = vld [vmem:[#allocation6 + $0xc] sm:$0xf]
    %v74 = vld [vmem:[#allocation6 + $0x10] sm:$0x3]
    %v75 = vld [vmem:[%s2] sm:$0x1]
    %v77 = vlaneseq
    %v78 = vshrl.u32 %v77, 7
    %v79 = vsub.s32 0, %v78
    %v80 = vrot.slane %v75, %v79
    %v87 = vunpack.c.l.b16 %v70
    %v88 = vunpack.c.l.b16 %v71
    %v89 = vunpack.c.l.b16 %v72
    %v90 = vunpack.c.l.b16 %v73
    %v91 = vunpack.c.l.b16 %v74
    %v92 = vpack.c.b16 %v88, %v87
    %v93 = vpack.c.b16 %v90, %v89
    %v94 = vpack.c.b16 %v91, %v91
    %vm97 = vcmask 293888
    %v99 = vsel %vm97, %v69, 0
    %vm101 = vcmask 1041408
    %v103 = vsel %vm101, %v94, 0
    %105 = vmatprep.subr.bf16.mxu0 0
    %106 = vmatpush1.bf16.msra.mxu0 %v92
    %107 = vmatprep.subr.bf16.mxu0 0
    %108 = vmatpush1.bf16.msra.mxu0 %v93
    %109 = vmatprep.subr.bf16.mxu0 0
    %110 = vmatpush1.bf16.msra.mxu0 %v103
    %111 = vmatprep.subr.bf16.mxu0 0
    %112 = vmatpush1.bf16.msra.mxu0 0
    %113 = vmatprep.subr.bf16.mxu0 0
    %114 = vmatpush1.bf16.msra.mxu0 0
    %115 = vmatprep.subr.bf16.mxu0 0
    %116 = vmatpush1.bf16.msra.mxu0 0
    %117 = vmatprep.subr.bf16.mxu0 0
    %118 = vmatpush1.bf16.msra.mxu0 0
    %119 = vmatprep.subr.bf16.mxu0 0
    %120 = vmatpush1.bf16.msra.mxu0 0
    %121 = vmatprep.subr.bf16.mxu0 0
    %122 = vmatpush1.bf16.msra.mxu0 0
    %123 = vmatprep.subr.bf16.mxu0 0
    %124 = vmatpush1.bf16.msra.mxu0 0
    %125 = vmatprep.subr.bf16.mxu0 0
    %126 = vmatpush1.bf16.msra.mxu0 0
    %127 = vmatprep.subr.bf16.mxu0 0
    %128 = vmatpush1.bf16.msra.mxu0 0
    %129 = vmatprep.subr.bf16.mxu0 0
    %130 = vmatpush1.bf16.msra.mxu0 0
    %131 = vmatprep.subr.bf16.mxu0 0
    %132 = vmatpush1.bf16.msra.mxu0 0
    %133 = vmatprep.subr.bf16.mxu0 0
    %134 = vmatpush1.bf16.msra.mxu0 0
    %135 = vmatprep.subr.bf16.mxu0 0
    %136 = vmatpush1.bf16.msra.mxu0 0
    %137 = vmatprep.mubr.bf16.mxu0 0
    %138 = vmatmul.mubr.bf16.gmra.mrb[0].mxu0 %v99
    %v139 = vpop.f32.mrb[0].mxu0
    %v140 = vadd.f32 %v80, %v139
    %v141 = vpop.f32.mrb[0].mxu0
    %v142 = vpop.f32.mrb[0].mxu0
    %v143 = vpop.f32.mrb[0].mxu0
    %144 = vdwg.mxu0
    %v145 = vmax.f32 %v140, 0.0
    %v146 = vpack.c.bf16 %v145, %v145
    %147 = vst [vmem:[#allocation2] sm:$0xf] %v146
    %v148 = vld [vmem:[#allocation2] sm:$0xf]
    %v149 = vld [vmem:[#allocation8] sm:$0xff]
    %v150 = vld [vmem:[#allocation8 + $0x8] sm:$0xff]
    %v151 = vld [vmem:[#allocation8 + $0x10] sm:$0xff]
    %v152 = vld [vmem:[#allocation8 + $0x18] sm:$0xff]
    %v153 = vld [vmem:[#allocation8 + $0x20] sm:$0xff]
    %v154 = vld [vmem:[#allocation8 + $0x28] sm:$0xff]
    %v155 = vld [vmem:[#allocation8 + $0x30] sm:$0xff]
    %v156 = vld [vmem:[#allocation8 + $0x38] sm:$0xff]
    %v157 = vld [vmem:[#allocation8 + $0x40] sm:$0xff]
    %v158 = vld [vmem:[#allocation8 + $0x48] sm:$0xff]
    %v159 = vld [vmem:[#allocation8 + $0x50] sm:$0xff]
    %v160 = vld [vmem:[#allocation8 + $0x58] sm:$0xff]
    %v161 = vld [vmem:[#allocation8 + $0x60] sm:$0xff]
    %v162 = vld [vmem:[#allocation8 + $0x68] sm:$0xff]
    %v163 = vld [vmem:[#allocation8 + $0x70] sm:$0xff]
    %v164 = vld [vmem:[#allocation8 + $0x78] sm:$0xff]
    %v165 = vld [vmem:[%s4] sm:$0x3]
    %v167 = vlaneseq
    %v168 = vshrl.u32 %v167, 7
    %v169 = vsub.s32 0, %v168
    %v170 = vrot.slane %v165, %v169
    %v171 = vlaneseq
    %v172 = vshrl.u32 %v171, 7
    %v173 = vsub.s32 1, %v172
    %v174 = vrot.slane %v165, %v173
    %v193 = vunpack.c.l.b16 %v149
    %v194 = vunpack.c.h.b16 %v149
    %v195 = vunpack.c.l.b16 %v150
    %v196 = vunpack.c.h.b16 %v150
    %v197 = vunpack.c.l.b16 %v151
    %v198 = vunpack.c.h.b16 %v151
    %v199 = vunpack.c.l.b16 %v152
    %v200 = vunpack.c.h.b16 %v152
    %v201 = vunpack.c.l.b16 %v153
    %v202 = vunpack.c.h.b16 %v153
    %v203 = vunpack.c.l.b16 %v154
    %v204 = vunpack.c.h.b16 %v154
    %v205 = vunpack.c.l.b16 %v155
    %v206 = vunpack.c.h.b16 %v155
    %v207 = vunpack.c.l.b16 %v156
    %v208 = vunpack.c.h.b16 %v156
    %v209 = vunpack.c.l.b16 %v157
    %v210 = vunpack.c.h.b16 %v157
    %v211 = vunpack.c.l.b16 %v158
    %v212 = vunpack.c.h.b16 %v158
    %v213 = vunpack.c.l.b16 %v159
    %v214 = vunpack.c.h.b16 %v159
    %v215 = vunpack.c.l.b16 %v160
    %v216 = vunpack.c.h.b16 %v160
    %v217 = vunpack.c.l.b16 %v161
    %v218 = vunpack.c.h.b16 %v161
    %v219 = vunpack.c.l.b16 %v162
    %v220 = vunpack.c.h.b16 %v162
    %v221 = vunpack.c.l.b16 %v163
    %v222 = vunpack.c.h.b16 %v163
    %v223 = vunpack.c.l.b16 %v164
    %v224 = vunpack.c.h.b16 %v164
    %v225 = vpack.c.b16 %v195, %v193
    %v226 = vpack.c.b16 %v196, %v194
    %v227 = vpack.c.b16 %v199, %v197
    %v228 = vpack.c.b16 %v200, %v198
    %v229 = vpack.c.b16 %v203, %v201
    %v230 = vpack.c.b16 %v204, %v202
    %v231 = vpack.c.b16 %v207, %v205
    %v232 = vpack.c.b16 %v208, %v206
    %v233 = vpack.c.b16 %v211, %v209
    %v234 = vpack.c.b16 %v212, %v210
    %v235 = vpack.c.b16 %v215, %v213
    %v236 = vpack.c.b16 %v216, %v214
    %v237 = vpack.c.b16 %v219, %v217
    %v238 = vpack.c.b16 %v220, %v218
    %v239 = vpack.c.b16 %v223, %v221
    %v240 = vpack.c.b16 %v224, %v222
    %257 = vmatprep.subr.bf16.mxu0 %v226
    %258 = vmatpush1.bf16.msra.mxu0 %v225
    %259 = vmatprep.subr.bf16.mxu0 %v228
    %260 = vmatpush1.bf16.msra.mxu0 %v227
    %261 = vmatprep.subr.bf16.mxu0 %v230
    %262 = vmatpush1.bf16.msra.mxu0 %v229
    %263 = vmatprep.subr.bf16.mxu0 %v232
    %264 = vmatpush1.bf16.msra.mxu0 %v231
    %265 = vmatprep.subr.bf16.mxu0 %v234
    %266 = vmatpush1.bf16.msra.mxu0 %v233
    %267 = vmatprep.subr.bf16.mxu0 %v236
    %268 = vmatpush1.bf16.msra.mxu0 %v235
    %269 = vmatprep.subr.bf16.mxu0 %v238
    %270 = vmatpush1.bf16.msra.mxu0 %v237
    %271 = vmatprep.subr.bf16.mxu0 %v240
    %272 = vmatpush1.bf16.msra.mxu0 %v239
    %273 = vmatprep.subr.bf16.mxu0 0
    %274 = vmatpush1.bf16.msra.mxu0 0
    %275 = vmatprep.subr.bf16.mxu0 0
    %276 = vmatpush1.bf16.msra.mxu0 0
    %277 = vmatprep.subr.bf16.mxu0 0
    %278 = vmatpush1.bf16.msra.mxu0 0
    %279 = vmatprep.subr.bf16.mxu0 0
    %280 = vmatpush1.bf16.msra.mxu0 0
    %281 = vmatprep.subr.bf16.mxu0 0
    %282 = vmatpush1.bf16.msra.mxu0 0
    %283 = vmatprep.subr.bf16.mxu0 0
    %284 = vmatpush1.bf16.msra.mxu0 0
    %285 = vmatprep.subr.bf16.mxu0 0
    %286 = vmatpush1.bf16.msra.mxu0 0
    %287 = vmatprep.subr.bf16.mxu0 0
    %288 = vmatpush1.bf16.msra.mxu0 0
    %289 = vmatprep.mubr.bf16.mxu0 0
    %290 = vmatmul.mubr.bf16.gmra.mrb[0].mxu0 %v148
    %v291 = vpop.f32.mrb[0].mxu0
    %v292 = vadd.f32 %v170, %v291
    %v293 = vpop.f32.mrb[0].mxu0
    %v294 = vadd.f32 %v174, %v293
    %v295 = vpop.f32.mrb[0].mxu0
    %v296 = vpop.f32.mrb[0].mxu0
    %297 = vdwg.mxu0
    %v298 = vmax.f32 %v292, 0.0
    %v299 = vmax.f32 %v294, 0.0
    %v300 = vld [vmem:[%s5] sm:$0x3]
    %v302 = vlaneseq
    %v303 = vshrl.u32 %v302, 7
    %v304 = vsub.s32 0, %v303
    %v305 = vrot.slane %v300, %v304
    %v306 = vlaneseq
    %v307 = vshrl.u32 %v306, 7
    %v308 = vsub.s32 1, %v307
    %v309 = vrot.slane %v300, %v308
    %v312 = vmul.f32 %v298, %v305
    %v313 = vmul.f32 %v299, %v309
    %v314 = vadd.f32 %v312, %v313
    %315 = vadd.xlane.f32.xlu0 %v314
    %v316 = vpop.xlane.xlu0 %315
    %v317 = vld [vmem:[#allocation3] sm:$0x1]
    %v319 = vlaneseq
    %v320 = vshrl.u32 %v319, 7
    %v321 = vsub.s32 0, %v320
    %v322 = vrot.slane %v317, %v321
    %v324 = vadd.f32 %v316, %v322
    %vm325 = vcmask 7168
    %326 = vst.msk [vmem:[%s7] sm:$0xff] %vm325, %v324
    // Predicated region
    $region42: #{tpu_custom_call.1} parent=1 // pred_check
      _
    $region43: #{tpu_custom_call.1} parent=1 // pred_check_branch
      %328 = sbr.rel (0) target = $region45
    $region44: #{tpu_custom_call.1} parent=1 // pred_region
      _
    $region45: #{tpu_custom_call.1} parent=1 // pred_fallthru
      _
    // Predicated region
    $region46: #{tpu_custom_call.1} parent=1 // pred_check
      _
    $region47: #{tpu_custom_call.1} parent=1 // pred_check_branch
      %330 = sbr.rel (0) target = $region49
    $region48: #{tpu_custom_call.1} parent=1 // pred_region
      _
    $region49: #{tpu_custom_call.1} parent=1 // pred_fallthru
      _
    %331 = vsyncpa [#allocation5], 1
    %332 = vsyncpa [#allocation7], 1

</llo_original>
